<compile_context>
chip_gen: v7x
topology: tpu7x:2x2x1
jax: 0.10.0
libtpu: 0.0.40
codegen_flags: <defaults>
</compile_context>

<pallas_src>
import jax
import jax.numpy as jnp
from jax.experimental import pallas as pl
from jax.experimental.pallas import tpu as pltpu


def _frozen_bn_kernel(x_ref, p_ref, o_ref):
    # x_ref/o_ref: (row_tile, hw_tile); p_ref: (row_tile, 2) f32 [scale, shift].
    p = p_ref[...]
    scale = p[:, 0:1]
    shift = p[:, 1:2]
    x = x_ref[...].astype(jnp.float32)
    o_ref[...] = (x * scale + shift).astype(o_ref.dtype)


def _round_up(v, m):
    return ((v + m - 1) // m) * m


_TARGET_BLOCK_BYTES = 4 * 1024 * 1024   # ~4 MiB of useful x bytes per block
_MAX_ROW_TILE = 4096                    # bounds lane-padded param footprint


def _pick_tiles(nc, hw, itemsize):
    """Pick (row_tile, hw_tile) for the (N*C, HW) view, sized by bytes."""
    target_elems = max(_TARGET_BLOCK_BYTES // itemsize, 8 * 128)

    # Lane (last) axis: multiple of 128 (unmasked vst), never exceeding HW.
    if hw < 128:
        hw_tile = hw                                      # full dim (allowed)
    else:
        max_hw = max(((target_elems // 8) // 128) * 128, 128)
        hw_tile = min((hw // 128) * 128, max_hw)

    # Sublane axis: multiple of 8, sized so the lane-padded block hits the
    # byte budget; ragged tail (via cdiv grid) covers any remainder.
    hw_padded = _round_up(hw_tile, 128)
    if nc < 8:
        row_tile = nc                                     # full dim (allowed)
    else:
        row_tile = ((target_elems // hw_padded) // 8) * 8
        row_tile = max(8, min(row_tile, (nc // 8) * 8, _MAX_ROW_TILE))
    return row_tile, hw_tile


def _vmem_limit_bytes():
    """Generation-aware VMEM limit (v7x: ~42 MiB of 64; v5e/v6e: 64 of 128)."""
    try:
        cap = int(pltpu.get_tpu_info().vmem_capacity_bytes)
    except Exception:
        cap = 64 * 1024 * 1024
    limit = min((cap * 2) // 3, 64 * 1024 * 1024)
    return max(limit, 32 * 1024 * 1024)


def frozen_batch_norm_2d(x, weight, bias, running_mean, running_var, eps=1e-5):
    """FrozenBatchNorm2d forward. x: (N, C, H, W); params: (C,)."""
    N, C, H, W = x.shape
    HW = H * W
    NC = N * C

    # Fold the four frozen parameters once, in f32.
    scale = weight.astype(jnp.float32) * jax.lax.rsqrt(
        running_var.astype(jnp.float32) + jnp.float32(eps)
    )
    shift = bias.astype(jnp.float32) - running_mean.astype(jnp.float32) * scale
    params = jnp.stack([scale, shift], axis=-1)               # (C, 2)
    params = jnp.broadcast_to(params[None], (N, C, 2)).reshape(NC, 2)

    # Lane-dense 2-D view: rows = N*C (sublanes), flattened spatial = lanes.
    x2 = x.reshape(NC, HW)

    row_tile, hw_tile = _pick_tiles(NC, HW, x.dtype.itemsize)
    row_blocks = pl.cdiv(NC, row_tile)
    hw_blocks = pl.cdiv(HW, hw_tile)

    # Put the better-populated parallel axis first (megacore balance on v7x).
    if row_blocks >= hw_blocks:
        grid = (row_blocks, hw_blocks)
        x_map = lambda i, j: (i, j)
        p_map = lambda i, j: (i, 0)
    else:
        grid = (hw_blocks, row_blocks)
        x_map = lambda j, i: (i, j)
        p_map = lambda j, i: (i, 0)

    x_spec = pl.BlockSpec((row_tile, hw_tile), x_map)
    p_spec = pl.BlockSpec((row_tile, 2), p_map)
    o_spec = pl.BlockSpec((row_tile, hw_tile), x_map)

    out2 = pl.pallas_call(
        _frozen_bn_kernel,
        out_shape=jax.ShapeDtypeStruct((NC, HW), x.dtype),
        grid_spec=pltpu.PrefetchScalarGridSpec(
            num_scalar_prefetch=0,
            grid=grid,
            in_specs=[x_spec, p_spec],
            out_specs=o_spec,
        ),
        compiler_params=pltpu.CompilerParams(
            dimension_semantics=("parallel", "parallel"),
            vmem_limit_bytes=_vmem_limit_bytes(),
        ),
    )(x2, params)

    return out2.reshape(N, C, H, W)


if __name__ == "__main__":
    key = jax.random.PRNGKey(0)
    N, C, H, W = 2, 4, 16, 16
    kx, kw, kb, km, kv = jax.random.split(key, 5)

    x = jax.random.normal(kx, (N, C, H, W), dtype=jnp.float32)

    # Deterministic "frozen" parameters (module __init__ gives ones/zeros;
    # perturb them deterministically so the affine transform is non-trivial).
    weight = jnp.ones((C,), jnp.float32) + 0.1 * jax.random.normal(kw, (C,))
    bias = jnp.zeros((C,), jnp.float32) + 0.1 * jax.random.normal(kb, (C,))
    running_mean = 0.05 * jax.random.normal(km, (C,))
    running_var = jnp.ones((C,), jnp.float32) + 0.1 * jnp.abs(
        jax.random.normal(kv, (C,))
    )

    eps = 1e-5
    out = frozen_batch_norm_2d(x, weight, bias, running_mean, running_var, eps)
    out = jax.block_until_ready(out)

    # Reference (plain JAX) check of the frozen-BN formula.
    scale_ref = weight.reshape(1, C, 1, 1) * jax.lax.rsqrt(
        running_var.reshape(1, C, 1, 1) + eps
    )
    bias_ref = bias.reshape(1, C, 1, 1) - running_mean.reshape(1, C, 1, 1) * scale_ref
    expected = x * scale_ref + bias_ref

    assert out.shape == (N, C, H, W)
    assert out.dtype == jnp.float32
    assert jnp.allclose(out, expected, atol=1e-5, rtol=1e-5)

    print("KERNEL_OK")
</pallas_src>

<mosaic_0001>
module attributes {stable_mosaic.version = 11 : i64} {
  func.func @_frozen_bn_kernel(%arg0: i32, %arg1: i32, %arg2: memref<8x256xf32, #tpu.memory_space<vmem>>, %arg3: memref<8x2xf32, #tpu.memory_space<vmem>>, %arg4: memref<8x256xf32, #tpu.memory_space<vmem>>) attributes {dimension_semantics = [#tpu.dimension_semantics<parallel>, #tpu.dimension_semantics<parallel>], iteration_bounds = array<i64: 1, 1>, scalar_prefetch = 0 : i64, scratch_operands = 0 : i64, tpu.core_type = #tpu.core_type<tc>, window_params = [{transform_indices = @transform_0, window_bounds = array<i64: 8, 256>}, {transform_indices = @transform_1, window_bounds = array<i64: 8, 2>}, {transform_indices = @transform_2, window_bounds = array<i64: 8, 256>}]} {
    %c0 = arith.constant 0 : index
    %c0_0 = arith.constant 0 : index
    %0 = vector.load %arg3[%c0, %c0_0] : memref<8x2xf32, #tpu.memory_space<vmem>>, vector<8x2xf32>
    %1 = vector.extract_strided_slice %0 {offsets = [0, 0], sizes = [8, 1], strides = [1, 1]} : vector<8x2xf32> to vector<8x1xf32>
    %2 = vector.extract_strided_slice %0 {offsets = [0, 1], sizes = [8, 1], strides = [1, 1]} : vector<8x2xf32> to vector<8x1xf32>
    %c0_1 = arith.constant 0 : index
    %c0_2 = arith.constant 0 : index
    %3 = vector.load %arg2[%c0_1, %c0_2] : memref<8x256xf32, #tpu.memory_space<vmem>>, vector<8x256xf32>
    %4 = vector.broadcast %1 : vector<8x1xf32> to vector<8x256xf32>
    %5 = arith.mulf %3, %4 : vector<8x256xf32>
    %6 = vector.broadcast %2 : vector<8x1xf32> to vector<8x256xf32>
    %7 = arith.addf %5, %6 : vector<8x256xf32>
    %c0_3 = arith.constant 0 : index
    %c0_4 = arith.constant 0 : index
    %8 = vector.load %arg4[%c0_3, %c0_4] : memref<8x256xf32, #tpu.memory_space<vmem>>, vector<8x256xf32>
    tpu.vector_store %arg4[%c0_3, %c0_4], %7 {strides = array<i32>} : memref<8x256xf32, #tpu.memory_space<vmem>>, vector<8x256xf32>,
    return
  }
  func.func @transform_0(%arg0: i32, %arg1: i32) -> (i32, i32) {
    %c0_i32 = arith.constant 0 : i32
    return %arg0, %arg1 : i32, i32
  }
  func.func @transform_1(%arg0: i32, %arg1: i32) -> (i32, i32) {
    %c0_i32 = arith.constant 0 : i32
    %c0_i32_0 = arith.constant 0 : i32
    return %arg0, %c0_i32 : i32, i32
  }
  func.func @transform_2(%arg0: i32, %arg1: i32) -> (i32, i32) {
    %c0_i32 = arith.constant 0 : i32
    return %arg0, %arg1 : i32, i32
  }
}

</mosaic_0001>

<llo_original>
// kernel: tpu_custom_call.1
$region0: #{tpu_custom_call.1}
  #allocation0 [shape = 'u32[]', space=smem, size = 0x4, offset = 0x4, fixed_abs, tag = 'smem constant byte address 0x4 - core index']
  #allocation1 [shape = 'u32[144,128]{1,0:T(1,128)}', space=vmem, size = 0x12000, scoped, tag = 'internal scratch']
  %s0 = inlined_call_operand.hbm [shape: f32[8,256], index: 0, kind: input, shape index: {}]
  %s1 = inlined_call_operand.vmem [shape: f32[8,2], index: 1, kind: input, shape index: {}]
  %s2 = inlined_call_operand.hbm [shape: f32[8,256], index: 2, kind: output, shape index: {}]
  %s3 = sld [smem:[#allocation0]]
  $region22: #{tpu_custom_call.1} parent=0
    _
  %s5 = ssub.s32 1, %s3
  %s6 = scalar_select 0, %s5, %s3
  $region1: #{tpu_custom_call.1} parent=0
    #allocation2 [shape = 'u8[8192]{0}', space=vmem, size = 0x2000, scoped, tag = 'input window, operand 0, single buffered']
    #allocation3 [shape = 's32[1]{0}', space=sflag, size = 0x4, scoped, tag = 'scoped memory for tpu_custom_call.1']
    #allocation4 [shape = 's32[1]{0}', space=sflag, size = 0x4, scoped, tag = 'scoped memory for tpu_custom_call.1']
    #allocation5 [shape = 'u8[8192]{0}', space=vmem, size = 0x2000, scoped, tag = 'output window, operand 0, single buffered']
    %7 = vsyncpa [#allocation3], 0
    %8 = vsyncpa [#allocation4], 0
    // Predicated region
    $region2: #{tpu_custom_call.1} parent=1 // pred_check
      _
    $region3: #{tpu_custom_call.1} parent=1 // pred_check_branch
      %10 = sbr.rel (0) target = $region5
    $region4: #{tpu_custom_call.1} parent=1 // pred_region
      %s12 = ssub.s32 256, 256
      %13 = vsyncadd [#allocation3], %s12
      %s15 = sshll.u32 [#allocation2], 4
      %s16 = int_to_ptr.vmem [resolvable:$true] %s15
      %18 = dma.hbm_to_vmem [thread:$0]  %s0, 256, %s16, [#allocation3]
    $region5: #{tpu_custom_call.1} parent=1 // pred_fallthru
      _
    // Predicated region
    $region6: #{tpu_custom_call.1} parent=1 // pred_check
      _
    $region7: #{tpu_custom_call.1} parent=1 // pred_check_branch
      %20 = sbr.rel (0) target = $region9
    $region8: #{tpu_custom_call.1} parent=1 // pred_region
      _
    $region9: #{tpu_custom_call.1} parent=1 // pred_fallthru
      _
    // Predicated region
    $region10: #{tpu_custom_call.1} parent=1 // pred_check
      _
    $region11: #{tpu_custom_call.1} parent=1 // pred_check_branch
      %22 = sbr.rel (0) target = $region13
    $region12: #{tpu_custom_call.1} parent=1 // pred_region
      %23 = dma.done [#allocation3], 256
    $region13: #{tpu_custom_call.1} parent=1 // pred_fallthru
      _
    %v24 = vld [vmem:[%s1] sm:$0xff]
    %v25 = vld [vmem:[#allocation2] sm:$0xff]
    %v26 = vld [vmem:[#allocation2 + $0x8] sm:$0xff]
    %28 = vset.pattern.permute.xlu0 0
    %29 = vperm.xlu0 %28, %v24
    %v30 = vpop.permute.xlu0 %29
    %v32 = vmul.f32 %v25, %v30
    %v33 = vmul.f32 %v26, %v30
    %34 = vset.pattern.permute.xlu0 1
    %35 = vperm.xlu0 %34, %v24
    %v36 = vpop.permute.xlu0 %35
    %v38 = vadd.f32 %v32, %v36
    %v39 = vadd.f32 %v33, %v36
    %40 = vst [vmem:[#allocation5] sm:$0xff] %v38
    %41 = vst [vmem:[#allocation5 + $0x8] sm:$0xff] %v39
    // Predicated region
    $region14: #{tpu_custom_call.1} parent=1 // pred_check
      _
    $region15: #{tpu_custom_call.1} parent=1 // pred_check_branch
      %43 = sbr.rel (0) target = $region17
    $region16: #{tpu_custom_call.1} parent=1 // pred_region
      %s45 = ssub.s32 256, 256
      %46 = vsyncadd [#allocation4], %s45
      %s48 = sshll.u32 [#allocation5], 4
      %s49 = int_to_ptr.vmem [resolvable:$true] %s48
      %51 = dma.vmem_to_hbm [thread:$0]  %s49, 256, %s2, [#allocation4]
    $region17: #{tpu_custom_call.1} parent=1 // pred_fallthru
      _
    // Predicated region
    $region18: #{tpu_custom_call.1} parent=1 // pred_check
      _
    $region19: #{tpu_custom_call.1} parent=1 // pred_check_branch
      %53 = sbr.rel (0) target = $region21
    $region20: #{tpu_custom_call.1} parent=1 // pred_region
      %54 = dma.done [#allocation4], 256
    $region21: #{tpu_custom_call.1} parent=1 // pred_fallthru
      _
    %55 = vsyncpa [#allocation3], 1
    %56 = vsyncpa [#allocation4], 1

</llo_original>
